<compile_context>
chip_gen: v6e
topology: v6e:2x2x1
jax: 0.10.0
libtpu: 0.0.40
codegen_flags: <defaults>
</compile_context>

<pallas_src>
import jax
import jax.numpy as jnp
from jax.experimental import pallas as pl
from jax.experimental.pallas import tpu as pltpu


# ----------------------------------------------------------------------------
# Fused MegNet-block kernel
# ----------------------------------------------------------------------------
def _megnet_block_kernel(
    node_ref,   # (na, H) f32
    edge_ref,   # (nb, H) f32
    gbl_ref,    # (1,  H) f32
    idx_ref,    # (max(na,nb), 2+md) int32: cols 0:2 = atom4bond, 2: = bond4atom
    wb_ref,     # (10H+3, H) f32 packed [bond_wt; atom_wt; unv_wt; 3 bias rows]
    out_ref,    # (na+nb+1, H) f32 packed [v_p rows; e_p rows; u_p row]
    cat_ref,    # VMEM scratch (max(na,nb), 4H) f32 - concat staging slab
):
    f32 = jnp.float32
    na, H = node_ref.shape
    nb = edge_ref.shape[0]
    md = idx_ref.shape[1] - 2

    node = node_ref[...]
    edge = edge_ref[...]
    gbl = gbl_ref[...]

    # static row slices of the packed weight+bias slab (zero-cost views)
    w_bond = wb_ref[0:4 * H, :]
    w_atom = wb_ref[4 * H:7 * H, :]
    w_unv = wb_ref[7 * H:10 * H, :]
    b_bond = wb_ref[10 * H + 0:10 * H + 1, :]
    b_atom = wb_ref[10 * H + 1:10 * H + 2, :]
    b_unv = wb_ref[10 * H + 2:10 * H + 3, :]

    def softplus(y):
        # SoftplusLayer: relu(x) + log(0.5*exp(-|x|) + 0.5)
        return jnp.maximum(y, 0.0) + jnp.log(0.5 * jnp.exp(-jnp.abs(y)) + 0.5)

    # ---- update_bond: gather endpoint atoms via one-hot matmuls -------------
    a4b = idx_ref[0:nb, 0:2]                                       # (nb,2) i32
    atom_iota = jax.lax.broadcasted_iota(jnp.int32, (nb, na), 1)
    oh0 = (a4b[:, 0:1] == atom_iota).astype(f32)                   # (nb, na)
    oh1 = (a4b[:, 1:2] == atom_iota).astype(f32)
    a0 = jnp.dot(oh0, node, preferred_element_type=f32)            # (nb, H)
    a1 = jnp.dot(oh1, node, preferred_element_type=f32)

    # in-VMEM concat [a0 | a1 | edge | gbl] -> one full-K (K=4H=128) matmul
    cat_ref[0:nb, 0:H] = a0
    cat_ref[0:nb, H:2 * H] = a1
    cat_ref[0:nb, 2 * H:3 * H] = edge
    cat_ref[0:nb, 3 * H:4 * H] = jnp.broadcast_to(gbl, (nb, H))
    y_b = jnp.dot(cat_ref[0:nb, :], w_bond, preferred_element_type=f32) + b_bond
    e_p = softplus(y_b)                                            # (nb, H)
    out_ref[na:na + nb, :] = e_p

    # ---- aggeregate_bond: masked scatter-mean via aggregation matmul --------
    # bond4atom entries assumed in [-1, nb): -1 = padding (never matches).
    b4a = idx_ref[0:na, 2:2 + md]                                  # (na,md) i32
    bond_iota = jax.lax.broadcasted_iota(jnp.int32, (na, nb), 1)
    agg = jnp.zeros((na, nb), f32)
    for d in range(md):                 # static, md is tiny
        agg = agg + (b4a[:, d:d + 1] == bond_iota).astype(f32)
    summation = jnp.dot(agg, e_p, preferred_element_type=f32)      # (na, H)
    count = jnp.sum(agg, axis=1, keepdims=True)                    # row-sum of agg
    b_ei_p = summation / jnp.maximum(count, 1.0)

    # ---- update_atom: in-VMEM concat [b_ei_p | node | gbl] -> one K=3H dot --
    cat_ref[0:na, 0:H] = b_ei_p
    cat_ref[0:na, H:2 * H] = node
    cat_ref[0:na, 2 * H:3 * H] = jnp.broadcast_to(gbl, (na, H))
    y_a = (jnp.dot(cat_ref[0:na, 0:3 * H], w_atom, preferred_element_type=f32)
           + b_atom)
    v_p = softplus(y_a)                                            # (na, H)
    out_ref[0:na, :] = v_p

    # ---- update_global -------------------------------------------------------
    mean_e = jnp.sum(e_p, axis=0, keepdims=True) * (1.0 / nb)      # (1, H)
    mean_v = jnp.sum(v_p, axis=0, keepdims=True) * (1.0 / na)
    cat_ref[0:1, 0:H] = mean_e
    cat_ref[0:1, H:2 * H] = mean_v
    cat_ref[0:1, 2 * H:3 * H] = gbl
    y_u = (jnp.dot(cat_ref[0:1, 0:3 * H], w_unv, preferred_element_type=f32)
           + b_unv)
    out_ref[na + nb:na + nb + 1, :] = softplus(y_u)


def _full_spec(shape):
    return pl.BlockSpec(shape, lambda i, _n=len(shape): (0,) * _n)


def megnet_block_fused(node, edge, gbl, idx, wb):
    """node:(na,H) edge:(nb,H) gbl:(1,H) idx:(max(na,nb),2+md)i32 wb:(10H+3,H)."""
    na, H = node.shape
    nb = edge.shape[0]
    M = na + nb + 1
    R = max(na, nb)
    return pl.pallas_call(
        _megnet_block_kernel,
        out_shape=jax.ShapeDtypeStruct((M, H), jnp.float32),
        grid=(1,),
        in_specs=[
            _full_spec(node.shape), _full_spec(edge.shape), _full_spec(gbl.shape),
            _full_spec(idx.shape), _full_spec(wb.shape),
        ],
        out_specs=_full_spec((M, H)),
        scratch_shapes=[pltpu.VMEM((R, 4 * H), jnp.float32)],
        compiler_params=pltpu.CompilerParams(
            dimension_semantics=("arbitrary",),
            vmem_limit_bytes=32 * 1024 * 1024),
    )(node, edge, gbl, idx, wb)


# ----------------------------------------------------------------------------
# Parameter init (deterministic, mimics torch.nn.Linear uniform init).
# Weights stored PRE-TRANSPOSED (in_f, out_f) and packed with biases into one
# (10H+3, H) slab: rows [0:4H)=bond W^T, [4H:7H)=atom W^T, [7H:10H)=unv W^T,
# rows 10H / 10H+1 / 10H+2 = bond / atom / unv bias.
# ----------------------------------------------------------------------------
def _init_linear(key, in_f, out_f):
    kw, kb = jax.random.split(key)
    bound = 1.0 / (in_f ** 0.5)
    w = jax.random.uniform(kw, (out_f, in_f), jnp.float32, -bound, bound)
    b = jax.random.uniform(kb, (out_f,), jnp.float32, -bound, bound)
    return jnp.transpose(w), b.reshape(1, out_f)


def init_block_params(key, bond_hidden, atom_hidden, unv_hidden):
    assert bond_hidden == atom_hidden == unv_hidden
    H = bond_hidden
    k1, k2, k3 = jax.random.split(key, 3)
    bond_wt, bond_b = _init_linear(k1, H * 4, H)
    atom_wt, atom_b = _init_linear(k2, H * 3, H)
    unv_wt, unv_b = _init_linear(k3, H * 3, H)
    wb = jnp.concatenate([bond_wt, atom_wt, unv_wt, bond_b, atom_b, unv_b],
                         axis=0)
    return dict(wb=wb)


# ----------------------------------------------------------------------------
# block.forward  (== megnet_layer.forward + eval-mode dropout)
# ----------------------------------------------------------------------------
@jax.jit
def block_forward(params, node_ftr, edge_ftr, gbl_ftr, atom4bond, bond4atom):
    B, na, H = node_ftr.shape
    assert B == 1, "aggeregate_bond (as in the PyTorch module) requires bs == 1"
    nb = edge_ftr.shape[1]
    md = bond4atom.shape[-1]
    a4b = atom4bond.astype(jnp.int32).reshape(nb, 2)     # truncation == .int()
    b4a = bond4atom.astype(jnp.int32).reshape(na, md)
    # pack both index arrays into one int32 input (pad rows with -1: no match)
    R = max(na, nb)
    a4b_p = jnp.pad(a4b, ((0, R - nb), (0, 0)), constant_values=-1)
    b4a_p = jnp.pad(b4a, ((0, R - na), (0, 0)), constant_values=-1)
    idx = jnp.concatenate([a4b_p, b4a_p], axis=1)
    slab = megnet_block_fused(node_ftr[0], edge_ftr[0],
                              gbl_ftr.reshape(1, H), idx, params["wb"])
    v_p = slab[0:na]
    e_p = slab[na:na + nb]
    u_p = slab[na + nb:na + nb + 1]
    # dropout (eval mode) -> identity
    return v_p[None], e_p[None], u_p                     # (1,na,H) (1,nb,H) (1,H)


# ----------------------------------------------------------------------------
# Pure-JAX reference (mirrors the PyTorch module step by step)
# ----------------------------------------------------------------------------
def block_forward_ref(params, node_ftr, edge_ftr, gbl_ftr, atom4bond, bond4atom):
    B, na, H = node_ftr.shape
    nb = edge_ftr.shape[1]
    wb = params["wb"]
    bond_wt, atom_wt, unv_wt = wb[0:4 * H], wb[4 * H:7 * H], wb[7 * H:10 * H]
    bond_b = wb[10 * H + 0:10 * H + 1]
    atom_b = wb[10 * H + 1:10 * H + 2]
    unv_b = wb[10 * H + 2:10 * H + 3]
    bs = jnp.arange(B)

    def lin_sp(x, wt, b):
        y = x @ wt + b
        return jnp.maximum(y, 0.0) + jnp.log(0.5 * jnp.exp(-jnp.abs(y)) + 0.5)

    a = node_ftr[bs, atom4bond.astype(jnp.int32), :].reshape(B, nb, -1)
    gr_b = jnp.repeat(gbl_ftr[:, None, :], nb, axis=1)
    e_p = lin_sp(jnp.concatenate([a, edge_ftr, gr_b], -1), bond_wt, bond_b)

    blank = jnp.zeros((1, 1, H), e_p.dtype)
    e_pad = jnp.concatenate([e_p, blank], axis=1)
    ag = e_pad[0, bond4atom.astype(jnp.int32), :]
    summation = ag.sum(axis=2)
    cnt = (bond4atom > -1).sum(-1, keepdims=True).astype(summation.dtype)
    b_ei_p = summation / jnp.maximum(jnp.ones_like(cnt), cnt)

    gr_a = jnp.repeat(gbl_ftr[:, None, :], na, axis=1)
    v_p = lin_sp(jnp.concatenate([b_ei_p, node_ftr, gr_a], -1), atom_wt, atom_b)

    cat_u = jnp.concatenate([e_p.mean(axis=1), v_p.mean(axis=1), gbl_ftr], -1)
    u_p = lin_sp(cat_u, unv_wt, unv_b)
    return v_p, e_p, u_p


# ----------------------------------------------------------------------------
if __name__ == "__main__":
    H = 32                      # bond_hidden == atom_hidden == unv_hidden
    B = 1                       # aggeregate_bond requires batch size 1
    N_ATOMS = 8
    N_BONDS = 16
    MAX_DEG = 4

    key = jax.random.PRNGKey(0)
    kp, k1, k2, k3, k4, k5 = jax.random.split(key, 6)

    params = init_block_params(kp, H, H, H)

    node_ftr = jax.random.normal(k1, (B, N_ATOMS, H), jnp.float32)
    edge_ftr = jax.random.normal(k2, (B, N_BONDS, H), jnp.float32)
    gbl_ftr = jax.random.normal(k3, (B, H), jnp.float32)
    # int32 end-to-end: two atom indices per bond, bond indices per atom
    # padded with -1 (MegNet convention).
    atom4bond = jax.random.randint(k4, (B, N_BONDS, 2), 0, N_ATOMS,
                                   dtype=jnp.int32)
    bond4atom = jax.random.randint(k5, (B, N_ATOMS, MAX_DEG), -1, N_BONDS,
                                   dtype=jnp.int32)

    v_p, e_p, u_p = block_forward(params, node_ftr, edge_ftr, gbl_ftr,
                                  atom4bond, bond4atom)
    jax.block_until_ready((v_p, e_p, u_p))

    assert v_p.shape == (B, N_ATOMS, H)
    assert e_p.shape == (B, N_BONDS, H)
    assert u_p.shape == (B, H)
    assert all(bool(jnp.all(jnp.isfinite(t))) for t in (v_p, e_p, u_p))

    # correctness vs pure-JAX reference (loose tol: MXU f32 dot precision)
    v_r, e_r, u_r = block_forward_ref(params, node_ftr, edge_ftr, gbl_ftr,
                                      atom4bond, bond4atom)
    for got, ref in ((v_p, v_r), (e_p, e_r), (u_p, u_r)):
        assert bool(jnp.allclose(got, ref, rtol=2e-2, atol=2e-2)), \
            float(jnp.max(jnp.abs(got - ref)))

    print("KERNEL_OK")
</pallas_src>

<mosaic_0001>
module attributes {stable_mosaic.version = 11 : i64} {
  func.func @_megnet_block_kernel(%arg0: i32, %arg1: memref<8x32xf32, #tpu.memory_space<vmem>>, %arg2: memref<16x32xf32, #tpu.memory_space<vmem>>, %arg3: memref<1x32xf32, #tpu.memory_space<vmem>>, %arg4: memref<16x6xi32, #tpu.memory_space<vmem>>, %arg5: memref<323x32xf32, #tpu.memory_space<vmem>>, %arg6: memref<25x32xf32, #tpu.memory_space<vmem>>, %arg7: memref<16x128xf32, #tpu.memory_space<vmem>>) attributes {dimension_semantics = [#tpu.dimension_semantics<arbitrary>], iteration_bounds = array<i64: 1>, scalar_prefetch = 0 : i64, scratch_operands = 1 : i64, tpu.core_type = #tpu.core_type<tc>, window_params = [{pipeline_mode = #tpu.pipeline_mode<synchronous>, transform_indices = @transform_0, window_bounds = array<i64: 8, 32>}, {pipeline_mode = #tpu.pipeline_mode<synchronous>, transform_indices = @transform_1, window_bounds = array<i64: 16, 32>}, {pipeline_mode = #tpu.pipeline_mode<synchronous>, transform_indices = @transform_2, window_bounds = array<i64: 1, 32>}, {pipeline_mode = #tpu.pipeline_mode<synchronous>, transform_indices = @transform_3, window_bounds = array<i64: 16, 6>}, {pipeline_mode = #tpu.pipeline_mode<synchronous>, transform_indices = @transform_4, window_bounds = array<i64: 323, 32>}, {pipeline_mode = #tpu.pipeline_mode<synchronous>, transform_indices = @transform_5, window_bounds = array<i64: 25, 32>}]} {
    %c0 = arith.constant 0 : index
    %c0_0 = arith.constant 0 : index
    %0 = vector.load %arg1[%c0, %c0_0] : memref<8x32xf32, #tpu.memory_space<vmem>>, vector<8x32xf32>
    %c0_1 = arith.constant 0 : index
    %c0_2 = arith.constant 0 : index
    %1 = vector.load %arg2[%c0_1, %c0_2] : memref<16x32xf32, #tpu.memory_space<vmem>>, vector<16x32xf32>
    %c0_3 = arith.constant 0 : index
    %c0_4 = arith.constant 0 : index
    %2 = vector.load %arg3[%c0_3, %c0_4] : memref<1x32xf32, #tpu.memory_space<vmem>>, vector<1x32xf32>
    %c0_5 = arith.constant 0 : index
    %c0_6 = arith.constant 0 : index
    %3 = vector.load %arg5[%c0_5, %c0_6] : memref<323x32xf32, #tpu.memory_space<vmem>>, vector<128x32xf32>
    %c128 = arith.constant 128 : index
    %c0_7 = arith.constant 0 : index
    %4 = vector.load %arg5[%c128, %c0_7] : memref<323x32xf32, #tpu.memory_space<vmem>>, vector<96x32xf32>
    %c224 = arith.constant 224 : index
    %c0_8 = arith.constant 0 : index
    %5 = vector.load %arg5[%c224, %c0_8] : memref<323x32xf32, #tpu.memory_space<vmem>>, vector<96x32xf32>
    %c320 = arith.constant 320 : index
    %c0_9 = arith.constant 0 : index
    %6 = vector.load %arg5[%c320, %c0_9] : memref<323x32xf32, #tpu.memory_space<vmem>>, vector<1x32xf32>
    %c321 = arith.constant 321 : index
    %c0_10 = arith.constant 0 : index
    %7 = vector.load %arg5[%c321, %c0_10] : memref<323x32xf32, #tpu.memory_space<vmem>>, vector<1x32xf32>
    %c322 = arith.constant 322 : index
    %c0_11 = arith.constant 0 : index
    %8 = vector.load %arg5[%c322, %c0_11] : memref<323x32xf32, #tpu.memory_space<vmem>>, vector<1x32xf32>
    %c0_12 = arith.constant 0 : index
    %c0_13 = arith.constant 0 : index
    %9 = vector.load %arg4[%c0_12, %c0_13] : memref<16x6xi32, #tpu.memory_space<vmem>>, vector<16x2xi32>
    %10 = tpu.iota {dimensions = array<i32: 1>} : vector<16x8xi32>
    %11 = vector.extract_strided_slice %9 {offsets = [0, 0], sizes = [16, 1], strides = [1, 1]} : vector<16x2xi32> to vector<16x1xi32>
    %12 = vector.broadcast %11 : vector<16x1xi32> to vector<16x8xi32>
    %13 = arith.cmpi eq, %12, %10 : vector<16x8xi32>
    %14 = arith.extui %13 : vector<16x8xi1> to vector<16x8xi32>
    %15 = arith.sitofp %14 : vector<16x8xi32> to vector<16x8xf32>
    %16 = vector.extract_strided_slice %9 {offsets = [0, 1], sizes = [16, 1], strides = [1, 1]} : vector<16x2xi32> to vector<16x1xi32>
    %17 = vector.broadcast %16 : vector<16x1xi32> to vector<16x8xi32>
    %18 = arith.cmpi eq, %17, %10 : vector<16x8xi32>
    %19 = arith.extui %18 : vector<16x8xi1> to vector<16x8xi32>
    %20 = arith.sitofp %19 : vector<16x8xi32> to vector<16x8xf32>
    %cst = arith.constant dense<0.000000e+00> : vector<16x32xf32>
    %21 = tpu.matmul %15, %0, %cst {dimension_numbers = #tpu.dot_dimension_numbers<[1], [0], [0], [1], [0, 0, 1, 1], [], []>} : vector<16x8xf32>, vector<8x32xf32>, vector<16x32xf32> -> vector<16x32xf32>
    %cst_14 = arith.constant dense<0.000000e+00> : vector<16x32xf32>
    %22 = tpu.matmul %20, %0, %cst_14 {dimension_numbers = #tpu.dot_dimension_numbers<[1], [0], [0], [1], [0, 0, 1, 1], [], []>} : vector<16x8xf32>, vector<8x32xf32>, vector<16x32xf32> -> vector<16x32xf32>
    %c0_15 = arith.constant 0 : index
    %c0_16 = arith.constant 0 : index
    %23 = vector.load %arg7[%c0_15, %c0_16] : memref<16x128xf32, #tpu.memory_space<vmem>>, vector<16x32xf32>
    tpu.vector_store %arg7[%c0_15, %c0_16], %21 {strides = array<i32>} : memref<16x128xf32, #tpu.memory_space<vmem>>, vector<16x32xf32>,
    %c0_17 = arith.constant 0 : index
    %c32 = arith.constant 32 : index
    %24 = vector.load %arg7[%c0_17, %c32] : memref<16x128xf32, #tpu.memory_space<vmem>>, vector<16x32xf32>
    tpu.vector_store %arg7[%c0_17, %c32], %22 {strides = array<i32>} : memref<16x128xf32, #tpu.memory_space<vmem>>, vector<16x32xf32>,
    %c0_18 = arith.constant 0 : index
    %c64 = arith.constant 64 : index
    %25 = vector.load %arg7[%c0_18, %c64] : memref<16x128xf32, #tpu.memory_space<vmem>>, vector<16x32xf32>
    tpu.vector_store %arg7[%c0_18, %c64], %1 {strides = array<i32>} : memref<16x128xf32, #tpu.memory_space<vmem>>, vector<16x32xf32>,
    %26 = vector.shape_cast %2 : vector<1x32xf32> to vector<1x32xf32>
    %27 = vector.broadcast %26 : vector<1x32xf32> to vector<16x32xf32>
    %c0_19 = arith.constant 0 : index
    %c96 = arith.constant 96 : index
    %28 = vector.load %arg7[%c0_19, %c96] : memref<16x128xf32, #tpu.memory_space<vmem>>, vector<16x32xf32>
    tpu.vector_store %arg7[%c0_19, %c96], %27 {strides = array<i32>} : memref<16x128xf32, #tpu.memory_space<vmem>>, vector<16x32xf32>,
    %c0_20 = arith.constant 0 : index
    %c0_21 = arith.constant 0 : index
    %29 = vector.load %arg7[%c0_20, %c0_21] : memref<16x128xf32, #tpu.memory_space<vmem>>, vector<16x128xf32>
    %cst_22 = arith.constant dense<0.000000e+00> : vector<16x32xf32>
    %30 = tpu.matmul %29, %3, %cst_22 {dimension_numbers = #tpu.dot_dimension_numbers<[1], [0], [0], [1], [0, 0, 1, 1], [], []>} : vector<16x128xf32>, vector<128x32xf32>, vector<16x32xf32> -> vector<16x32xf32>
    %31 = vector.broadcast %6 : vector<1x32xf32> to vector<16x32xf32>
    %32 = arith.addf %30, %31 : vector<16x32xf32>
    %cst_23 = arith.constant 0.000000e+00 : f32
    %33 = vector.broadcast %cst_23 : f32 to vector<16x32xf32>
    %34 = arith.maximumf %32, %33 : vector<16x32xf32>
    %35 = math.absf %32 : vector<16x32xf32>
    %cst_24 = arith.constant 0.000000e+00 : f32
    %36 = vector.broadcast %cst_24 : f32 to vector<16x32xf32>
    %37 = arith.subf %36, %35 : vector<16x32xf32>
    %38 = math.exp %37 : vector<16x32xf32>
    %cst_25 = arith.constant 5.000000e-01 : f32
    %39 = vector.broadcast %cst_25 : f32 to vector<16x32xf32>
    %40 = arith.mulf %39, %38 : vector<16x32xf32>
    %cst_26 = arith.constant 5.000000e-01 : f32
    %41 = vector.broadcast %cst_26 : f32 to vector<16x32xf32>
    %42 = arith.addf %40, %41 : vector<16x32xf32>
    %43 = math.log %42 : vector<16x32xf32>
    %44 = arith.addf %34, %43 : vector<16x32xf32>
    %c8 = arith.constant 8 : index
    %c0_27 = arith.constant 0 : index
    %45 = vector.load %arg6[%c8, %c0_27] : memref<25x32xf32, #tpu.memory_space<vmem>>, vector<16x32xf32>
    tpu.vector_store %arg6[%c8, %c0_27], %44 {strides = array<i32>} : memref<25x32xf32, #tpu.memory_space<vmem>>, vector<16x32xf32>,
    %c0_28 = arith.constant 0 : index
    %c2 = arith.constant 2 : index
    %46 = vector.load %arg4[%c0_28, %c2] : memref<16x6xi32, #tpu.memory_space<vmem>>, vector<8x4xi32>
    %47 = tpu.iota {dimensions = array<i32: 1>} : vector<8x16xi32>
    %cst_29 = arith.constant 0.000000e+00 : f32
    %48 = vector.broadcast %cst_29 : f32 to vector<8x16xf32>
    %49 = vector.extract_strided_slice %46 {offsets = [0, 0], sizes = [8, 1], strides = [1, 1]} : vector<8x4xi32> to vector<8x1xi32>
    %50 = vector.broadcast %49 : vector<8x1xi32> to vector<8x16xi32>
    %51 = arith.cmpi eq, %50, %47 : vector<8x16xi32>
    %52 = arith.extui %51 : vector<8x16xi1> to vector<8x16xi32>
    %53 = arith.sitofp %52 : vector<8x16xi32> to vector<8x16xf32>
    %54 = arith.addf %48, %53 : vector<8x16xf32>
    %55 = vector.extract_strided_slice %46 {offsets = [0, 1], sizes = [8, 1], strides = [1, 1]} : vector<8x4xi32> to vector<8x1xi32>
    %56 = vector.broadcast %55 : vector<8x1xi32> to vector<8x16xi32>
    %57 = arith.cmpi eq, %56, %47 : vector<8x16xi32>
    %58 = arith.extui %57 : vector<8x16xi1> to vector<8x16xi32>
    %59 = arith.sitofp %58 : vector<8x16xi32> to vector<8x16xf32>
    %60 = arith.addf %54, %59 : vector<8x16xf32>
    %61 = vector.extract_strided_slice %46 {offsets = [0, 2], sizes = [8, 1], strides = [1, 1]} : vector<8x4xi32> to vector<8x1xi32>
    %62 = vector.broadcast %61 : vector<8x1xi32> to vector<8x16xi32>
    %63 = arith.cmpi eq, %62, %47 : vector<8x16xi32>
    %64 = arith.extui %63 : vector<8x16xi1> to vector<8x16xi32>
    %65 = arith.sitofp %64 : vector<8x16xi32> to vector<8x16xf32>
    %66 = arith.addf %60, %65 : vector<8x16xf32>
    %67 = vector.extract_strided_slice %46 {offsets = [0, 3], sizes = [8, 1], strides = [1, 1]} : vector<8x4xi32> to vector<8x1xi32>
    %68 = vector.broadcast %67 : vector<8x1xi32> to vector<8x16xi32>
    %69 = arith.cmpi eq, %68, %47 : vector<8x16xi32>
    %70 = arith.extui %69 : vector<8x16xi1> to vector<8x16xi32>
    %71 = arith.sitofp %70 : vector<8x16xi32> to vector<8x16xf32>
    %72 = arith.addf %66, %71 : vector<8x16xf32>
    %cst_30 = arith.constant dense<0.000000e+00> : vector<8x32xf32>
    %73 = tpu.matmul %72, %44, %cst_30 {dimension_numbers = #tpu.dot_dimension_numbers<[1], [0], [0], [1], [0, 0, 1, 1], [], []>} : vector<8x16xf32>, vector<16x32xf32>, vector<8x32xf32> -> vector<8x32xf32>
    %cst_31 = arith.constant dense<0.000000e+00> : vector<8xf32>
    %74 = vector.multi_reduction <add>, %72, %cst_31 [1] : vector<8x16xf32> to vector<8xf32>
    %75 = vector.shape_cast %74 : vector<8xf32> to vector<8x1xf32>
    %cst_32 = arith.constant 1.000000e+00 : f32
    %76 = vector.broadcast %cst_32 : f32 to vector<8x1xf32>
    %77 = arith.maximumf %75, %76 : vector<8x1xf32>
    %78 = vector.broadcast %77 : vector<8x1xf32> to vector<8x32xf32>
    %79 = arith.divf %73, %78 : vector<8x32xf32>
    %c0_33 = arith.constant 0 : index
    %c0_34 = arith.constant 0 : index
    %80 = vector.load %arg7[%c0_33, %c0_34] : memref<16x128xf32, #tpu.memory_space<vmem>>, vector<8x32xf32>
    tpu.vector_store %arg7[%c0_33, %c0_34], %79 {strides = array<i32>} : memref<16x128xf32, #tpu.memory_space<vmem>>, vector<8x32xf32>,
    %c0_35 = arith.constant 0 : index
    %c32_36 = arith.constant 32 : index
    %81 = vector.load %arg7[%c0_35, %c32_36] : memref<16x128xf32, #tpu.memory_space<vmem>>, vector<8x32xf32>
    tpu.vector_store %arg7[%c0_35, %c32_36], %0 {strides = array<i32>} : memref<16x128xf32, #tpu.memory_space<vmem>>, vector<8x32xf32>,
    %82 = vector.shape_cast %2 : vector<1x32xf32> to vector<1x32xf32>
    %83 = vector.broadcast %82 : vector<1x32xf32> to vector<8x32xf32>
    %c0_37 = arith.constant 0 : index
    %c64_38 = arith.constant 64 : index
    %84 = vector.load %arg7[%c0_37, %c64_38] : memref<16x128xf32, #tpu.memory_space<vmem>>, vector<8x32xf32>
    tpu.vector_store %arg7[%c0_37, %c64_38], %83 {strides = array<i32>} : memref<16x128xf32, #tpu.memory_space<vmem>>, vector<8x32xf32>,
    %c0_39 = arith.constant 0 : index
    %c0_40 = arith.constant 0 : index
    %85 = vector.load %arg7[%c0_39, %c0_40] : memref<16x128xf32, #tpu.memory_space<vmem>>, vector<8x96xf32>
    %cst_41 = arith.constant dense<0.000000e+00> : vector<8x32xf32>
    %86 = tpu.matmul %85, %4, %cst_41 {dimension_numbers = #tpu.dot_dimension_numbers<[1], [0], [0], [1], [0, 0, 1, 1], [], []>} : vector<8x96xf32>, vector<96x32xf32>, vector<8x32xf32> -> vector<8x32xf32>
    %87 = vector.broadcast %7 : vector<1x32xf32> to vector<8x32xf32>
    %88 = arith.addf %86, %87 : vector<8x32xf32>
    %cst_42 = arith.constant 0.000000e+00 : f32
    %89 = vector.broadcast %cst_42 : f32 to vector<8x32xf32>
    %90 = arith.maximumf %88, %89 : vector<8x32xf32>
    %91 = math.absf %88 : vector<8x32xf32>
    %cst_43 = arith.constant 0.000000e+00 : f32
    %92 = vector.broadcast %cst_43 : f32 to vector<8x32xf32>
    %93 = arith.subf %92, %91 : vector<8x32xf32>
    %94 = math.exp %93 : vector<8x32xf32>
    %cst_44 = arith.constant 5.000000e-01 : f32
    %95 = vector.broadcast %cst_44 : f32 to vector<8x32xf32>
    %96 = arith.mulf %95, %94 : vector<8x32xf32>
    %cst_45 = arith.constant 5.000000e-01 : f32
    %97 = vector.broadcast %cst_45 : f32 to vector<8x32xf32>
    %98 = arith.addf %96, %97 : vector<8x32xf32>
    %99 = math.log %98 : vector<8x32xf32>
    %100 = arith.addf %90, %99 : vector<8x32xf32>
    %c0_46 = arith.constant 0 : index
    %c0_47 = arith.constant 0 : index
    %101 = vector.load %arg6[%c0_46, %c0_47] : memref<25x32xf32, #tpu.memory_space<vmem>>, vector<8x32xf32>
    tpu.vector_store %arg6[%c0_46, %c0_47], %100 {strides = array<i32>} : memref<25x32xf32, #tpu.memory_space<vmem>>, vector<8x32xf32>,
    %cst_48 = arith.constant dense<0.000000e+00> : vector<32xf32>
    %102 = vector.multi_reduction <add>, %44, %cst_48 [0] : vector<16x32xf32> to vector<32xf32>
    %103 = vector.shape_cast %102 : vector<32xf32> to vector<1x32xf32>
    %cst_49 = arith.constant 6.250000e-02 : f32
    %104 = vector.broadcast %cst_49 : f32 to vector<1x32xf32>
    %105 = arith.mulf %103, %104 : vector<1x32xf32>
    %cst_50 = arith.constant dense<0.000000e+00> : vector<32xf32>
    %106 = vector.multi_reduction <add>, %100, %cst_50 [0] : vector<8x32xf32> to vector<32xf32>
    %107 = vector.shape_cast %106 : vector<32xf32> to vector<1x32xf32>
    %cst_51 = arith.constant 1.250000e-01 : f32
    %108 = vector.broadcast %cst_51 : f32 to vector<1x32xf32>
    %109 = arith.mulf %107, %108 : vector<1x32xf32>
    %c0_52 = arith.constant 0 : index
    %c0_53 = arith.constant 0 : index
    %110 = vector.load %arg7[%c0_52, %c0_53] : memref<16x128xf32, #tpu.memory_space<vmem>>, vector<1x32xf32>
    tpu.vector_store %arg7[%c0_52, %c0_53], %105 {strides = array<i32>} : memref<16x128xf32, #tpu.memory_space<vmem>>, vector<1x32xf32>,
    %c0_54 = arith.constant 0 : index
    %c32_55 = arith.constant 32 : index
    %111 = vector.load %arg7[%c0_54, %c32_55] : memref<16x128xf32, #tpu.memory_space<vmem>>, vector<1x32xf32>
    tpu.vector_store %arg7[%c0_54, %c32_55], %109 {strides = array<i32>} : memref<16x128xf32, #tpu.memory_space<vmem>>, vector<1x32xf32>,
    %c0_56 = arith.constant 0 : index
    %c64_57 = arith.constant 64 : index
    %112 = vector.load %arg7[%c0_56, %c64_57] : memref<16x128xf32, #tpu.memory_space<vmem>>, vector<1x32xf32>
    tpu.vector_store %arg7[%c0_56, %c64_57], %2 {strides = array<i32>} : memref<16x128xf32, #tpu.memory_space<vmem>>, vector<1x32xf32>,
    %c0_58 = arith.constant 0 : index
    %c0_59 = arith.constant 0 : index
    %113 = vector.load %arg7[%c0_58, %c0_59] : memref<16x128xf32, #tpu.memory_space<vmem>>, vector<1x96xf32>
    %cst_60 = arith.constant dense<0.000000e+00> : vector<1x32xf32>
    %114 = tpu.matmul %113, %5, %cst_60 {dimension_numbers = #tpu.dot_dimension_numbers<[1], [0], [0], [1], [0, 0, 1, 1], [], []>} : vector<1x96xf32>, vector<96x32xf32>, vector<1x32xf32> -> vector<1x32xf32>
    %115 = arith.addf %114, %8 : vector<1x32xf32>
    %cst_61 = arith.constant 0.000000e+00 : f32
    %116 = vector.broadcast %cst_61 : f32 to vector<1x32xf32>
    %117 = arith.maximumf %115, %116 : vector<1x32xf32>
    %118 = math.absf %115 : vector<1x32xf32>
    %cst_62 = arith.constant 0.000000e+00 : f32
    %119 = vector.broadcast %cst_62 : f32 to vector<1x32xf32>
    %120 = arith.subf %119, %118 : vector<1x32xf32>
    %121 = math.exp %120 : vector<1x32xf32>
    %cst_63 = arith.constant 5.000000e-01 : f32
    %122 = vector.broadcast %cst_63 : f32 to vector<1x32xf32>
    %123 = arith.mulf %122, %121 : vector<1x32xf32>
    %cst_64 = arith.constant 5.000000e-01 : f32
    %124 = vector.broadcast %cst_64 : f32 to vector<1x32xf32>
    %125 = arith.addf %123, %124 : vector<1x32xf32>
    %126 = math.log %125 : vector<1x32xf32>
    %127 = arith.addf %117, %126 : vector<1x32xf32>
    %c24 = arith.constant 24 : index
    %c0_65 = arith.constant 0 : index
    %128 = vector.load %arg6[%c24, %c0_65] : memref<25x32xf32, #tpu.memory_space<vmem>>, vector<1x32xf32>
    tpu.vector_store %arg6[%c24, %c0_65], %127 {strides = array<i32>} : memref<25x32xf32, #tpu.memory_space<vmem>>, vector<1x32xf32>,
    return
  }
  func.func @transform_0(%arg0: i32) -> (i32, i32) {
    %c0_i32 = arith.constant 0 : i32
    %c0_i32_0 = arith.constant 0 : i32
    %c0_i32_1 = arith.constant 0 : i32
    return %c0_i32, %c0_i32_0 : i32, i32
  }
  func.func @transform_1(%arg0: i32) -> (i32, i32) {
    %c0_i32 = arith.constant 0 : i32
    %c0_i32_0 = arith.constant 0 : i32
    %c0_i32_1 = arith.constant 0 : i32
    return %c0_i32, %c0_i32_0 : i32, i32
  }
  func.func @transform_2(%arg0: i32) -> (i32, i32) {
    %c0_i32 = arith.constant 0 : i32
    %c0_i32_0 = arith.constant 0 : i32
    %c0_i32_1 = arith.constant 0 : i32
    return %c0_i32, %c0_i32_0 : i32, i32
  }
  func.func @transform_3(%arg0: i32) -> (i32, i32) {
    %c0_i32 = arith.constant 0 : i32
    %c0_i32_0 = arith.constant 0 : i32
    %c0_i32_1 = arith.constant 0 : i32
    return %c0_i32, %c0_i32_0 : i32, i32
  }
  func.func @transform_4(%arg0: i32) -> (i32, i32) {
    %c0_i32 = arith.constant 0 : i32
    %c0_i32_0 = arith.constant 0 : i32
    %c0_i32_1 = arith.constant 0 : i32
    return %c0_i32, %c0_i32_0 : i32, i32
  }
  func.func @transform_5(%arg0: i32) -> (i32, i32) {
    %c0_i32 = arith.constant 0 : i32
    %c0_i32_0 = arith.constant 0 : i32
    %c0_i32_1 = arith.constant 0 : i32
    return %c0_i32, %c0_i32_0 : i32, i32
  }
}

</mosaic_0001>

<llo_original>
// kernel: block_forward.1
$region0: #{block_forward.1}
  #allocation0 [shape = 'u32[]', space=smem, size = 0x4, offset = 0x4, fixed_abs, tag = 'smem constant byte address 0x4 - core index']
  #allocation1 [shape = 'u32[144,128]{1,0:T(1,128)}', space=vmem, size = 0x12000, scoped, tag = 'internal scratch']
  #allocation2 [shape = 'f32[16,128]{1,0:T(8,128)}', space=vmem, size = 0x2000, scoped, tag = 'scratch operand']
  %s0 = inlined_call_operand.vmem [shape: f32[8,32], index: 0, kind: input, shape index: {}]
  %s1 = inlined_call_operand.vmem [shape: f32[16,32], index: 1, kind: input, shape index: {}]
  %s2 = inlined_call_operand.vmem [shape: f32[1,32], index: 2, kind: input, shape index: {}]
  %s3 = inlined_call_operand.vmem [shape: s32[16,6], index: 3, kind: input, shape index: {}]
  %s4 = inlined_call_operand.vmem [shape: f32[323,32], index: 4, kind: input, shape index: {}]
  %s5 = inlined_call_operand.vmem [shape: f32[25,32], index: 5, kind: output, shape index: {}]
  %s6 = sld [smem:[#allocation0]]
  $region30: #{block_forward.1} parent=0
    _
  %s8 = ssub.s32 1, %s6
  %s9 = scalar_select 0, %s8, %s6
  // Predicated region
  $region2: #{block_forward.1} parent=0 // pred_check
    _
  $region3: #{block_forward.1} parent=0 // pred_check_branch
    %11 = sbr.rel (0) target = $region5
  $region4: #{block_forward.1} parent=0 // pred_region
    _
  $region5: #{block_forward.1} parent=0 // pred_fallthru
    _
  // Predicated region
  $region6: #{block_forward.1} parent=0 // pred_check
    _
  $region7: #{block_forward.1} parent=0 // pred_check_branch
    %13 = sbr.rel (0) target = $region9
  $region8: #{block_forward.1} parent=0 // pred_region
    _
  $region9: #{block_forward.1} parent=0 // pred_fallthru
    _
  // Predicated region
  $region10: #{block_forward.1} parent=0 // pred_check
    _
  $region11: #{block_forward.1} parent=0 // pred_check_branch
    %15 = sbr.rel (0) target = $region13
  $region12: #{block_forward.1} parent=0 // pred_region
    _
  $region13: #{block_forward.1} parent=0 // pred_fallthru
    _
  // Predicated region
  $region14: #{block_forward.1} parent=0 // pred_check
    _
  $region15: #{block_forward.1} parent=0 // pred_check_branch
    %17 = sbr.rel (0) target = $region17
  $region16: #{block_forward.1} parent=0 // pred_region
    _
  $region17: #{block_forward.1} parent=0 // pred_fallthru
    _
  // Predicated region
  $region18: #{block_forward.1} parent=0 // pred_check
    _
  $region19: #{block_forward.1} parent=0 // pred_check_branch
    %19 = sbr.rel (0) target = $region21
  $region20: #{block_forward.1} parent=0 // pred_region
    _
  $region21: #{block_forward.1} parent=0 // pred_fallthru
    _
  %v20 = vld [vmem:[%s0] sm:$0xff]
  %v21 = vld [vmem:[%s1] sm:$0xff]
  %v22 = vld [vmem:[%s1 + $0x8] sm:$0xff]
  %v23 = vld [vmem:[%s2] sm:$0x1]
  %v24 = vld [vmem:[%s4] sm:$0xff]
  %v25 = vld [vmem:[%s4 + $0x8] sm:$0xff]
  %v26 = vld [vmem:[%s4 + $0x10] sm:$0xff]
  %v27 = vld [vmem:[%s4 + $0x18] sm:$0xff]
  %v28 = vld [vmem:[%s4 + $0x20] sm:$0xff]
  %v29 = vld [vmem:[%s4 + $0x28] sm:$0xff]
  %v30 = vld [vmem:[%s4 + $0x30] sm:$0xff]
  %v31 = vld [vmem:[%s4 + $0x38] sm:$0xff]
  %v32 = vld [vmem:[%s4 + $0x40] sm:$0xff]
  %v33 = vld [vmem:[%s4 + $0x48] sm:$0xff]
  %v34 = vld [vmem:[%s4 + $0x50] sm:$0xff]
  %v35 = vld [vmem:[%s4 + $0x58] sm:$0xff]
  %v36 = vld [vmem:[%s4 + $0x60] sm:$0xff]
  %v37 = vld [vmem:[%s4 + $0x68] sm:$0xff]
  %v38 = vld [vmem:[%s4 + $0x70] sm:$0xff]
  %v39 = vld [vmem:[%s4 + $0x78] sm:$0xff]
  %v40 = vld [vmem:[%s4 + $0x80] sm:$0xff]
  %v41 = vld [vmem:[%s4 + $0x88] sm:$0xff]
  %v42 = vld [vmem:[%s4 + $0x90] sm:$0xff]
  %v43 = vld [vmem:[%s4 + $0x98] sm:$0xff]
  %v44 = vld [vmem:[%s4 + $0xa0] sm:$0xff]
  %v45 = vld [vmem:[%s4 + $0xa8] sm:$0xff]
  %v46 = vld [vmem:[%s4 + $0xb0] sm:$0xff]
  %v47 = vld [vmem:[%s4 + $0xb8] sm:$0xff]
  %v48 = vld [vmem:[%s4 + $0xc0] sm:$0xff]
  %v49 = vld [vmem:[%s4 + $0xc8] sm:$0xff]
  %v50 = vld [vmem:[%s4 + $0xd0] sm:$0xff]
  %v51 = vld [vmem:[%s4 + $0xd8] sm:$0xff]
  %v52 = vld [vmem:[%s4 + $0xe0] sm:$0xff]
  %v53 = vld [vmem:[%s4 + $0xe8] sm:$0xff]
  %v54 = vld [vmem:[%s4 + $0xf0] sm:$0xff]
  %v55 = vld [vmem:[%s4 + $0xf8] sm:$0xff]
  %v56 = vld [vmem:[%s4 + $0x100] sm:$0xff]
  %v57 = vld [vmem:[%s4 + $0x108] sm:$0xff]
  %v58 = vld [vmem:[%s4 + $0x110] sm:$0xff]
  %v59 = vld [vmem:[%s4 + $0x118] sm:$0xff]
  %v60 = vld [vmem:[%s4 + $0x120] sm:$0xff]
  %v61 = vld [vmem:[%s4 + $0x128] sm:$0xff]
  %v62 = vld [vmem:[%s4 + $0x130] sm:$0xff]
  %v63 = vld [vmem:[%s4 + $0x138] sm:$0xff]
  %v64 = vld [vmem:[%s4 + $0x140] sm:$0x1]
  %v65 = vld [vmem:[%s4 + $0x141] sm:$0x1]
  %v66 = vld [vmem:[%s4 + $0x142] sm:$0x1]
  %v67 = vld [vmem:[%s3] sm:$0xff]
  %v68 = vld [vmem:[%s3 + $0x8] sm:$0xff]
  %v69 = vlaneseq
  %v70 = vand.u32 %v69, 127
  %71 = vset.pattern.permute.xlu0 0
  %72 = vperm.xlu0 %71, %v67
  %v73 = vpop.permute.xlu0 %72
  %74 = vset.pattern.permute.xlu0 0
  %75 = vperm.xlu0 %74, %v68
  %v76 = vpop.permute.xlu0 %75
  %vm77 = vcmp.eq.s32.totalorder %v73, %v70
  %vm78 = vcmp.eq.s32.totalorder %v76, %v70
  %v79 = vsel %vm77, 1, 0
  %v80 = vsel %vm78, 1, 0
  %v81 = vcvt.s32.f32 %v79
  %v82 = vcvt.s32.f32 %v80
  %83 = vset.pattern.permute.xlu0 1
  %84 = vperm.xlu0 %83, %v67
  %v85 = vpop.permute.xlu0 %84
  %86 = vset.pattern.permute.xlu0 1
  %87 = vperm.xlu0 %86, %v68
  %v88 = vpop.permute.xlu0 %87
  %vm89 = vcmp.eq.s32.totalorder %v85, %v70
  %vm90 = vcmp.eq.s32.totalorder %v88, %v70
  %v91 = vsel %vm89, 1, 0
  %v92 = vsel %vm90, 1, 0
  %v93 = vcvt.s32.f32 %v91
  %v94 = vcvt.s32.f32 %v92
  %vm95 = vcmask 64512
  %v97 = vsel %vm95, %v81, 0
  %v100 = vsel %vm95, %v82, 0
  %102 = vmatprep.subr.mxu0 0.0
  %103 = vmatpush1.msra.mxu0 0.0
  %104 = vmatprep.subr.mxu0 0.0
  %105 = vmatpush1.msra.mxu0 0.0
  %106 = vmatprep.subr.mxu0 0.0
  %107 = vmatpush1.msra.mxu0 0.0
  %108 = vmatprep.subr.mxu0 0.0
  %109 = vmatpush1.msra.mxu0 0.0
  %110 = vmatprep.subr.mxu0 0.0
  %111 = vmatpush1.msra.mxu0 0.0
  %112 = vmatprep.subr.mxu0 0.0
  %113 = vmatpush1.msra.mxu0 0.0
  %114 = vmatprep.subr.mxu0 0.0
  %115 = vmatpush1.msra.mxu0 0.0
  %116 = vmatprep.subr.mxu0 0.0
  %117 = vmatpush1.msra.mxu0 0.0
  %118 = vmatprep.subr.mxu0 0.0
  %119 = vmatpush1.msra.mxu0 0.0
  %120 = vmatprep.subr.mxu0 0.0
  %121 = vmatpush1.msra.mxu0 0.0
  %122 = vmatprep.subr.mxu0 0.0
  %123 = vmatpush1.msra.mxu0 0.0
  %124 = vmatprep.subr.mxu0 0.0
  %125 = vmatpush1.msra.mxu0 0.0
  %126 = vmatprep.subr.mxu0 0.0
  %127 = vmatpush1.msra.mxu0 0.0
  %128 = vmatprep.subr.mxu0 0.0
  %129 = vmatpush1.msra.mxu0 0.0
  %130 = vmatprep.subr.mxu0 0.0
  %131 = vmatpush1.msra.mxu0 0.0
  %132 = vmatprep.subr.mxu0 0.0
  %133 = vmatpush1.msra.mxu0 %v20
  %134 = vmatprep.subr.mxu0 0.0
  %135 = vmatpush2.msra.mxu0 0.0
  %136 = vmatprep.subr.mxu0 0.0
  %137 = vmatpush2.msra.mxu0 0.0
  %138 = vmatprep.subr.mxu0 0.0
  %139 = vmatpush2.msra.mxu0 0.0
  %140 = vmatprep.subr.mxu0 0.0
  %141 = vmatpush2.msra.mxu0 0.0
  %142 = vmatprep.subr.mxu0 0.0
  %143 = vmatpush2.msra.mxu0 0.0
  %144 = vmatprep.subr.mxu0 0.0
  %145 = vmatpush2.msra.mxu0 0.0
  %146 = vmatprep.subr.mxu0 0.0
  %147 = vmatpush2.msra.mxu0 0.0
  %148 = vmatprep.subr.mxu0 0.0
  %149 = vmatpush2.msra.mxu0 0.0
  %150 = vmatprep.subr.mxu0 0.0
  %151 = vmatpush2.msra.mxu0 0.0
  %152 = vmatprep.subr.mxu0 0.0
  %153 = vmatpush2.msra.mxu0 0.0
  %154 = vmatprep.subr.mxu0 0.0
  %155 = vmatpush2.msra.mxu0 0.0
  %156 = vmatprep.subr.mxu0 0.0
  %157 = vmatpush2.msra.mxu0 0.0
  %158 = vmatprep.subr.mxu0 0.0
  %159 = vmatpush2.msra.mxu0 0.0
  %160 = vmatprep.subr.mxu0 0.0
  %161 = vmatpush2.msra.mxu0 0.0
  %162 = vmatprep.subr.mxu0 0.0
  %163 = vmatpush2.msra.mxu0 0.0
  %164 = vmatprep.subr.mxu0 0.0
  %165 = vmatpush2.msra.mxu0 0.0
  %166 = vmatprep.mubr.f32.mxu0 0.0
  %167 = vmatmul.mubr.f32.gmra.mxu0 %v97
  %v168 = vpop.f32.mrf.mxu0
  %v169 = vadd.f32 0.0, %v168
  %v170 = vpop.f32.mrf.mxu0
  %171 = vmatprep.mubr.f32.mxu0 0.0
  %172 = vmatmul.mubr.f32.gmra.mxu0 %v100
  %v173 = vpop.f32.mrf.mxu0
  %v174 = vadd.f32 0.0, %v173
  %v175 = vpop.f32.mrf.mxu0
  %176 = vdwg.mxu0
  %v178 = vsel %vm95, %v93, 0
  %v181 = vsel %vm95, %v94, 0
  %183 = vmatprep.subr.mxu0 0.0
  %184 = vmatpush1.msra.mxu0 0.0
  %185 = vmatprep.subr.mxu0 0.0
  %186 = vmatpush1.msra.mxu0 0.0
  %187 = vmatprep.subr.mxu0 0.0
  %188 = vmatpush1.msra.mxu0 0.0
  %189 = vmatprep.subr.mxu0 0.0
  %190 = vmatpush1.msra.mxu0 0.0
  %191 = vmatprep.subr.mxu0 0.0
  %192 = vmatpush1.msra.mxu0 0.0
  %193 = vmatprep.subr.mxu0 0.0
  %194 = vmatpush1.msra.mxu0 0.0
  %195 = vmatprep.subr.mxu0 0.0
  %196 = vmatpush1.msra.mxu0 0.0
  %197 = vmatprep.subr.mxu0 0.0
  %198 = vmatpush1.msra.mxu0 0.0
  %199 = vmatprep.subr.mxu0 0.0
  %200 = vmatpush1.msra.mxu0 0.0
  %201 = vmatprep.subr.mxu0 0.0
  %202 = vmatpush1.msra.mxu0 0.0
  %203 = vmatprep.subr.mxu0 0.0
  %204 = vmatpush1.msra.mxu0 0.0
  %205 = vmatprep.subr.mxu0 0.0
  %206 = vmatpush1.msra.mxu0 0.0
  %207 = vmatprep.subr.mxu0 0.0
  %208 = vmatpush1.msra.mxu0 0.0
  %209 = vmatprep.subr.mxu0 0.0
  %210 = vmatpush1.msra.mxu0 0.0
  %211 = vmatprep.subr.mxu0 0.0
  %212 = vmatpush1.msra.mxu0 0.0
  %213 = vmatprep.subr.mxu0 0.0
  %214 = vmatpush1.msra.mxu0 %v20
  %215 = vmatprep.subr.mxu0 0.0
  %216 = vmatpush2.msra.mxu0 0.0
  %217 = vmatprep.subr.mxu0 0.0
  %218 = vmatpush2.msra.mxu0 0.0
  %219 = vmatprep.subr.mxu0 0.0
  %220 = vmatpush2.msra.mxu0 0.0
  %221 = vmatprep.subr.mxu0 0.0
  %222 = vmatpush2.msra.mxu0 0.0
  %223 = vmatprep.subr.mxu0 0.0
  %224 = vmatpush2.msra.mxu0 0.0
  %225 = vmatprep.subr.mxu0 0.0
  %226 = vmatpush2.msra.mxu0 0.0
  %227 = vmatprep.subr.mxu0 0.0
  %228 = vmatpush2.msra.mxu0 0.0
  %229 = vmatprep.subr.mxu0 0.0
  %230 = vmatpush2.msra.mxu0 0.0
  %231 = vmatprep.subr.mxu0 0.0
  %232 = vmatpush2.msra.mxu0 0.0
  %233 = vmatprep.subr.mxu0 0.0
  %234 = vmatpush2.msra.mxu0 0.0
  %235 = vmatprep.subr.mxu0 0.0
  %236 = vmatpush2.msra.mxu0 0.0
  %237 = vmatprep.subr.mxu0 0.0
  %238 = vmatpush2.msra.mxu0 0.0
  %239 = vmatprep.subr.mxu0 0.0
  %240 = vmatpush2.msra.mxu0 0.0
  %241 = vmatprep.subr.mxu0 0.0
  %242 = vmatpush2.msra.mxu0 0.0
  %243 = vmatprep.subr.mxu0 0.0
  %244 = vmatpush2.msra.mxu0 0.0
  %245 = vmatprep.subr.mxu0 0.0
  %246 = vmatpush2.msra.mxu0 0.0
  %247 = vmatprep.mubr.f32.mxu0 0.0
  %248 = vmatmul.mubr.f32.gmra.mxu0 %v178
  %v249 = vpop.f32.mrf.mxu0
  %v250 = vadd.f32 0.0, %v249
  %v251 = vpop.f32.mrf.mxu0
  %252 = vmatprep.mubr.f32.mxu0 0.0
  %253 = vmatmul.mubr.f32.gmra.mxu0 %v181
  %v254 = vpop.f32.mrf.mxu0
  %v255 = vadd.f32 0.0, %v254
  %v256 = vpop.f32.mrf.mxu0
  %257 = vdwg.mxu0
  %vm258 = vcmask 261120
  %259 = vst.msk [vmem:[#allocation2] sm:$0xff] %vm258, %v169
  %260 = vst.msk [vmem:[#allocation2 + $0x8] sm:$0xff] %vm258, %v174
  %263 = vrot.lane.b32.xlu0 %v250, 32
  %v264 = vpop.permute.xlu0 %263
  %265 = vrot.lane.b32.xlu0 %v255, 32
  %v266 = vpop.permute.xlu0 %265
  %vm269 = vcmask 523520
  %270 = vst.msk [vmem:[#allocation2] sm:$0xff] %vm269, %v264
  %271 = vst.msk [vmem:[#allocation2 + $0x8] sm:$0xff] %vm269, %v266
  %274 = vrot.lane.b32.xlu0 %v21, 64
  %v275 = vpop.permute.xlu0 %274
  %276 = vrot.lane.b32.xlu0 %v22, 64
  %v277 = vpop.permute.xlu0 %276
  %vm280 = vcmask 785920
  %281 = vst.msk [vmem:[#allocation2] sm:$0xff] %vm280, %v275
  %282 = vst.msk [vmem:[#allocation2 + $0x8] sm:$0xff] %vm280, %v277
  %v284 = vlaneseq
  %v285 = vshrl.u32 %v284, 7
  %v286 = vsub.s32 0, %v285
  %v287 = vrot.slane %v23, %v286
  %288 = vrot.lane.b32.xlu0 %v287, 96
  %v289 = vpop.permute.xlu0 %288
  %vm291 = vcmask 1048320
  %292 = vst.msk [vmem:[#allocation2] sm:$0xff] %vm291, %v289
  %293 = vst.msk [vmem:[#allocation2 + $0x8] sm:$0xff] %vm291, %v289
  %v294 = vld [vmem:[#allocation2] sm:$0xff]
  %v295 = vld [vmem:[#allocation2 + $0x8] sm:$0xff]
  %v296 = vlaneseq
  %v297 = vshrl.u32 %v296, 7
  %v298 = vsub.s32 0, %v297
  %v299 = vrot.slane %v64, %v298
  %300 = vmatprep.subr.mxu0 0.0
  %301 = vmatpush1.msra.mxu0 %v39
  %302 = vmatprep.subr.mxu0 0.0
  %303 = vmatpush1.msra.mxu0 %v38
  %304 = vmatprep.subr.mxu0 0.0
  %305 = vmatpush1.msra.mxu0 %v37
  %306 = vmatprep.subr.mxu0 0.0
  %307 = vmatpush1.msra.mxu0 %v36
  %308 = vmatprep.subr.mxu0 0.0
  %309 = vmatpush1.msra.mxu0 %v35
  %310 = vmatprep.subr.mxu0 0.0
  %311 = vmatpush1.msra.mxu0 %v34
  %312 = vmatprep.subr.mxu0 0.0
  %313 = vmatpush1.msra.mxu0 %v33
  %314 = vmatprep.subr.mxu0 0.0
  %315 = vmatpush1.msra.mxu0 %v32
  %316 = vmatprep.subr.mxu0 0.0
  %317 = vmatpush1.msra.mxu0 %v31
  %318 = vmatprep.subr.mxu0 0.0
  %319 = vmatpush1.msra.mxu0 %v30
  %320 = vmatprep.subr.mxu0 0.0
  %321 = vmatpush1.msra.mxu0 %v29
  %322 = vmatprep.subr.mxu0 0.0
  %323 = vmatpush1.msra.mxu0 %v28
  %324 = vmatprep.subr.mxu0 0.0
  %325 = vmatpush1.msra.mxu0 %v27
  %326 = vmatprep.subr.mxu0 0.0
  %327 = vmatpush1.msra.mxu0 %v26
  %328 = vmatprep.subr.mxu0 0.0
  %329 = vmatpush1.msra.mxu0 %v25
  %330 = vmatprep.subr.mxu0 0.0
  %331 = vmatpush1.msra.mxu0 %v24
  %332 = vmatprep.subr.mxu0 0.0
  %333 = vmatpush2.msra.mxu0 0.0
  %334 = vmatprep.subr.mxu0 0.0
  %335 = vmatpush2.msra.mxu0 0.0
  %336 = vmatprep.subr.mxu0 0.0
  %337 = vmatpush2.msra.mxu0 0.0
  %338 = vmatprep.subr.mxu0 0.0
  %339 = vmatpush2.msra.mxu0 0.0
  %340 = vmatprep.subr.mxu0 0.0
  %341 = vmatpush2.msra.mxu0 0.0
  %342 = vmatprep.subr.mxu0 0.0
  %343 = vmatpush2.msra.mxu0 0.0
  %344 = vmatprep.subr.mxu0 0.0
  %345 = vmatpush2.msra.mxu0 0.0
  %346 = vmatprep.subr.mxu0 0.0
  %347 = vmatpush2.msra.mxu0 0.0
  %348 = vmatprep.subr.mxu0 0.0
  %349 = vmatpush2.msra.mxu0 0.0
  %350 = vmatprep.subr.mxu0 0.0
  %351 = vmatpush2.msra.mxu0 0.0
  %352 = vmatprep.subr.mxu0 0.0
  %353 = vmatpush2.msra.mxu0 0.0
  %354 = vmatprep.subr.mxu0 0.0
  %355 = vmatpush2.msra.mxu0 0.0
  %356 = vmatprep.subr.mxu0 0.0
  %357 = vmatpush2.msra.mxu0 0.0
  %358 = vmatprep.subr.mxu0 0.0
  %359 = vmatpush2.msra.mxu0 0.0
  %360 = vmatprep.subr.mxu0 0.0
  %361 = vmatpush2.msra.mxu0 0.0
  %362 = vmatprep.subr.mxu0 0.0
  %363 = vmatpush2.msra.mxu0 0.0
  %364 = vmatprep.mubr.f32.mxu0 0.0
  %365 = vmatmul.mubr.f32.gmra.mxu0 %v294
  %v366 = vpop.f32.mrf.mxu0
  %v367 = vadd.f32 %v299, %v366
  %v368 = vpop.f32.mrf.mxu0
  %369 = vmatprep.mubr.f32.mxu0 0.0
  %370 = vmatmul.mubr.f32.gmra.mxu0 %v295
  %v371 = vpop.f32.mrf.mxu0
  %v372 = vadd.f32 %v299, %v371
  %v373 = vpop.f32.mrf.mxu0
  %374 = vdwg.mxu0
  %v375 = vmax.f32 %v367, 0.0
  %v376 = vmax.f32 %v372, 0.0
  %v377 = vand.u32 2147483647, %v367
  %v378 = vand.u32 2147483647, %v372
  %v379 = vsub.f32 0.0, %v377
  %v380 = vsub.f32 0.0, %v378
  %v381 = vmul.f32 %v379, 1.442695
  %v382 = vpow.pop %v381
  %v383 = vmul.f32 %v380, 1.442695
  %v384 = vpow.pop %v383
  %v385 = vmul.f32 %v382, 0.5
  %v386 = vmul.f32 %v384, 0.5
  %v387 = vadd.f32 %v385, 0.5
  %v388 = vadd.f32 %v386, 0.5
  %v389 = vlog2.pop %v387
  %v390 = vmul.f32 %v389, 0.6931472
  %v391 = vlog2.pop %v388
  %v392 = vmul.f32 %v391, 0.6931472
  %v393 = vadd.f32 %v375, %v390
  %v394 = vadd.f32 %v376, %v392
  %395 = vst.msk [vmem:[%s5 + $0x8] sm:$0xff] %vm258, %v393
  %396 = vst.msk [vmem:[%s5 + $0x10] sm:$0xff] %vm258, %v394
  %v397 = vld [vmem:[%s3] sm:$0xff]
  %398 = vset.pattern.permute.xlu0 2
  %399 = vperm.xlu0 %398, %v397
  %v400 = vpop.permute.xlu0 %399
  %vm401 = vcmp.eq.s32.totalorder %v400, %v70
  %v402 = vsel %vm401, 1, 0
  %v403 = vcvt.s32.f32 %v402
  %v404 = vadd.f32 %v403, 0.0
  %405 = vset.pattern.permute.xlu0 3
  %406 = vperm.xlu0 %405, %v397
  %v407 = vpop.permute.xlu0 %406
  %vm408 = vcmp.eq.s32.totalorder %v407, %v70
  %v409 = vsel %vm408, 1, 0
  %v410 = vcvt.s32.f32 %v409
  %v411 = vadd.f32 %v404, %v410
  %412 = vset.pattern.permute.xlu0 4
  %413 = vperm.xlu0 %412, %v397
  %v414 = vpop.permute.xlu0 %413
  %vm415 = vcmp.eq.s32.totalorder %v414, %v70
  %v416 = vsel %vm415, 1, 0
  %v417 = vcvt.s32.f32 %v416
  %v418 = vadd.f32 %v411, %v417
  %419 = vset.pattern.permute.xlu0 5
  %420 = vperm.xlu0 %419, %v397
  %v421 = vpop.permute.xlu0 %420
  %vm422 = vcmp.eq.s32.totalorder %v421, %v70
  %v423 = vsel %vm422, 1, 0
  %v424 = vcvt.s32.f32 %v423
  %v425 = vadd.f32 %v418, %v424
  %vm426 = vcmask 130048
  %v428 = vsel %vm426, %v425, 0
  %430 = vmatprep.subr.mxu0 0.0
  %431 = vmatpush1.msra.mxu0 0.0
  %432 = vmatprep.subr.mxu0 0.0
  %433 = vmatpush1.msra.mxu0 0.0
  %434 = vmatprep.subr.mxu0 0.0
  %435 = vmatpush1.msra.mxu0 0.0
  %436 = vmatprep.subr.mxu0 0.0
  %437 = vmatpush1.msra.mxu0 0.0
  %438 = vmatprep.subr.mxu0 0.0
  %439 = vmatpush1.msra.mxu0 0.0
  %440 = vmatprep.subr.mxu0 0.0
  %441 = vmatpush1.msra.mxu0 0.0
  %442 = vmatprep.subr.mxu0 0.0
  %443 = vmatpush1.msra.mxu0 0.0
  %444 = vmatprep.subr.mxu0 0.0
  %445 = vmatpush1.msra.mxu0 0.0
  %446 = vmatprep.subr.mxu0 0.0
  %447 = vmatpush1.msra.mxu0 0.0
  %448 = vmatprep.subr.mxu0 0.0
  %449 = vmatpush1.msra.mxu0 0.0
  %450 = vmatprep.subr.mxu0 0.0
  %451 = vmatpush1.msra.mxu0 0.0
  %452 = vmatprep.subr.mxu0 0.0
  %453 = vmatpush1.msra.mxu0 0.0
  %454 = vmatprep.subr.mxu0 0.0
  %455 = vmatpush1.msra.mxu0 0.0
  %456 = vmatprep.subr.mxu0 0.0
  %457 = vmatpush1.msra.mxu0 0.0
  %458 = vmatprep.subr.mxu0 0.0
  %459 = vmatpush1.msra.mxu0 %v394
  %460 = vmatprep.subr.mxu0 0.0
  %461 = vmatpush1.msra.mxu0 %v393
  %462 = vmatprep.subr.mxu0 0.0
  %463 = vmatpush2.msra.mxu0 0.0
  %464 = vmatprep.subr.mxu0 0.0
  %465 = vmatpush2.msra.mxu0 0.0
  %466 = vmatprep.subr.mxu0 0.0
  %467 = vmatpush2.msra.mxu0 0.0
  %468 = vmatprep.subr.mxu0 0.0
  %469 = vmatpush2.msra.mxu0 0.0
  %470 = vmatprep.subr.mxu0 0.0
  %471 = vmatpush2.msra.mxu0 0.0
  %472 = vmatprep.subr.mxu0 0.0
  %473 = vmatpush2.msra.mxu0 0.0
  %474 = vmatprep.subr.mxu0 0.0
  %475 = vmatpush2.msra.mxu0 0.0
  %476 = vmatprep.subr.mxu0 0.0
  %477 = vmatpush2.msra.mxu0 0.0
  %478 = vmatprep.subr.mxu0 0.0
  %479 = vmatpush2.msra.mxu0 0.0
  %480 = vmatprep.subr.mxu0 0.0
  %481 = vmatpush2.msra.mxu0 0.0
  %482 = vmatprep.subr.mxu0 0.0
  %483 = vmatpush2.msra.mxu0 0.0
  %484 = vmatprep.subr.mxu0 0.0
  %485 = vmatpush2.msra.mxu0 0.0
  %486 = vmatprep.subr.mxu0 0.0
  %487 = vmatpush2.msra.mxu0 0.0
  %488 = vmatprep.subr.mxu0 0.0
  %489 = vmatpush2.msra.mxu0 0.0
  %490 = vmatprep.subr.mxu0 0.0
  %491 = vmatpush2.msra.mxu0 0.0
  %492 = vmatprep.subr.mxu0 0.0
  %493 = vmatpush2.msra.mxu0 0.0
  %494 = vmatprep.mubr.f32.mxu0 0.0
  %495 = vmatmul.mubr.f32.gmra.mxu0 %v428
  %v496 = vpop.f32.mrf.mxu0
  %v497 = vadd.f32 0.0, %v496
  %v498 = vpop.f32.mrf.mxu0
  %499 = vdwg.mxu0
  %v500 = vsel %vm426, %v425, 0.0
  %501 = vadd.xlane.f32.xlu0 %v500
  %v502 = vpop.xlane.xlu0 %501
  %v503 = vmax.f32 %v502, 1.0
  %v504 = vrcp.pop %v503
  %v505 = vmul.f32 %v497, %v504
  %506 = vst.msk [vmem:[#allocation2] sm:$0xff] %vm258, %v505
  %508 = vrot.lane.b32.xlu0 %v20, 32
  %v509 = vpop.permute.xlu0 %508
  %511 = vst.msk [vmem:[#allocation2] sm:$0xff] %vm269, %v509
  %512 = vrot.lane.b32.xlu0 %v287, 64
  %v513 = vpop.permute.xlu0 %512
  %515 = vst.msk [vmem:[#allocation2] sm:$0xff] %vm280, %v513
  %v516 = vld [vmem:[#allocation2] sm:$0xff]
  %v517 = vlaneseq
  %v518 = vshrl.u32 %v517, 7
  %v519 = vsub.s32 0, %v518
  %v520 = vrot.slane %v65, %v519
  %vm521 = vcmask 785408
  %v523 = vsel %vm521, %v516, 0
  %525 = vmatprep.subr.mxu0 0.0
  %526 = vmatpush1.msra.mxu0 0.0
  %527 = vmatprep.subr.mxu0 0.0
  %528 = vmatpush1.msra.mxu0 0.0
  %529 = vmatprep.subr.mxu0 0.0
  %530 = vmatpush1.msra.mxu0 0.0
  %531 = vmatprep.subr.mxu0 0.0
  %532 = vmatpush1.msra.mxu0 0.0
  %533 = vmatprep.subr.mxu0 0.0
  %534 = vmatpush1.msra.mxu0 %v51
  %535 = vmatprep.subr.mxu0 0.0
  %536 = vmatpush1.msra.mxu0 %v50
  %537 = vmatprep.subr.mxu0 0.0
  %538 = vmatpush1.msra.mxu0 %v49
  %539 = vmatprep.subr.mxu0 0.0
  %540 = vmatpush1.msra.mxu0 %v48
  %541 = vmatprep.subr.mxu0 0.0
  %542 = vmatpush1.msra.mxu0 %v47
  %543 = vmatprep.subr.mxu0 0.0
  %544 = vmatpush1.msra.mxu0 %v46
  %545 = vmatprep.subr.mxu0 0.0
  %546 = vmatpush1.msra.mxu0 %v45
  %547 = vmatprep.subr.mxu0 0.0
  %548 = vmatpush1.msra.mxu0 %v44
  %549 = vmatprep.subr.mxu0 0.0
  %550 = vmatpush1.msra.mxu0 %v43
  %551 = vmatprep.subr.mxu0 0.0
  %552 = vmatpush1.msra.mxu0 %v42
  %553 = vmatprep.subr.mxu0 0.0
  %554 = vmatpush1.msra.mxu0 %v41
  %555 = vmatprep.subr.mxu0 0.0
  %556 = vmatpush1.msra.mxu0 %v40
  %557 = vmatprep.subr.mxu0 0.0
  %558 = vmatpush2.msra.mxu0 0.0
  %559 = vmatprep.subr.mxu0 0.0
  %560 = vmatpush2.msra.mxu0 0.0
  %561 = vmatprep.subr.mxu0 0.0
  %562 = vmatpush2.msra.mxu0 0.0
  %563 = vmatprep.subr.mxu0 0.0
  %564 = vmatpush2.msra.mxu0 0.0
  %565 = vmatprep.subr.mxu0 0.0
  %566 = vmatpush2.msra.mxu0 0.0
  %567 = vmatprep.subr.mxu0 0.0
  %568 = vmatpush2.msra.mxu0 0.0
  %569 = vmatprep.subr.mxu0 0.0
  %570 = vmatpush2.msra.mxu0 0.0
  %571 = vmatprep.subr.mxu0 0.0
  %572 = vmatpush2.msra.mxu0 0.0
  %573 = vmatprep.subr.mxu0 0.0
  %574 = vmatpush2.msra.mxu0 0.0
  %575 = vmatprep.subr.mxu0 0.0
  %576 = vmatpush2.msra.mxu0 0.0
  %577 = vmatprep.subr.mxu0 0.0
  %578 = vmatpush2.msra.mxu0 0.0
  %579 = vmatprep.subr.mxu0 0.0
  %580 = vmatpush2.msra.mxu0 0.0
  %581 = vmatprep.subr.mxu0 0.0
  %582 = vmatpush2.msra.mxu0 0.0
  %583 = vmatprep.subr.mxu0 0.0
  %584 = vmatpush2.msra.mxu0 0.0
  %585 = vmatprep.subr.mxu0 0.0
  %586 = vmatpush2.msra.mxu0 0.0
  %587 = vmatprep.subr.mxu0 0.0
  %588 = vmatpush2.msra.mxu0 0.0
  %589 = vmatprep.mubr.f32.mxu0 0.0
  %590 = vmatmul.mubr.f32.gmra.mxu0 %v523
  %v591 = vpop.f32.mrf.mxu0
  %v592 = vadd.f32 %v520, %v591
  %v593 = vpop.f32.mrf.mxu0
  %594 = vdwg.mxu0
  %v595 = vmax.f32 %v592, 0.0
  %v596 = vand.u32 2147483647, %v592
  %v597 = vsub.f32 0.0, %v596
  %v598 = vmul.f32 %v597, 1.442695
  %v599 = vpow.pop %v598
  %v600 = vmul.f32 %v599, 0.5
  %v601 = vadd.f32 %v600, 0.5
  %v602 = vlog2.pop %v601
  %v603 = vmul.f32 %v602, 0.6931472
  %v604 = vadd.f32 %v595, %v603
  %605 = vst.msk [vmem:[%s5] sm:$0xff] %vm258, %v604
  %v606 = vsel %vm258, %v393, 0.0
  %v607 = vsel %vm258, %v394, 0.0
  %v608 = vadd.f32 %v606, %v607
  %v609 = vrot.slane %v608, 4
  %v610 = vadd.f32 %v608, %v609
  %v611 = vrot.slane %v610, 2
  %v612 = vadd.f32 %v610, %v611
  %v613 = vrot.slane %v612, 1
  %v614 = vadd.f32 %v612, %v613
  %v615 = vmul.f32 %v614, 0.0625
  %v616 = vsel %vm258, %v604, 0.0
  %v617 = vrot.slane %v616, 4
  %v618 = vadd.f32 %v616, %v617
  %v619 = vrot.slane %v618, 2
  %v620 = vadd.f32 %v618, %v619
  %v621 = vrot.slane %v620, 1
  %v622 = vadd.f32 %v620, %v621
  %v623 = vmul.f32 %v622, 0.125
  %vm624 = vcmask 253952
  %625 = vst.msk [vmem:[#allocation2] sm:$0x1] %vm624, %v615
  %627 = vrot.lane.b32.xlu0 %v623, 32
  %v628 = vpop.permute.xlu0 %627
  %vm630 = vcmask 516352
  %631 = vst.msk [vmem:[#allocation2] sm:$0x1] %vm630, %v628
  %vm632 = vcmask 778752
  %633 = vst.msk [vmem:[#allocation2] sm:$0x1] %vm632, %v513
  %v634 = vld [vmem:[#allocation2] sm:$0x1]
  %v636 = vsel %vm521, %v634, 0
  %638 = vmatprep.subr.mxu0 0.0
  %639 = vmatpush1.msra.mxu0 0.0
  %640 = vmatprep.subr.mxu0 0.0
  %641 = vmatpush1.msra.mxu0 0.0
  %642 = vmatprep.subr.mxu0 0.0
  %643 = vmatpush1.msra.mxu0 0.0
  %644 = vmatprep.subr.mxu0 0.0
  %645 = vmatpush1.msra.mxu0 0.0
  %646 = vmatprep.subr.mxu0 0.0
  %647 = vmatpush1.msra.mxu0 %v63
  %648 = vmatprep.subr.mxu0 0.0
  %649 = vmatpush1.msra.mxu0 %v62
  %650 = vmatprep.subr.mxu0 0.0
  %651 = vmatpush1.msra.mxu0 %v61
  %652 = vmatprep.subr.mxu0 0.0
  %653 = vmatpush1.msra.mxu0 %v60
  %654 = vmatprep.subr.mxu0 0.0
  %655 = vmatpush1.msra.mxu0 %v59
  %656 = vmatprep.subr.mxu0 0.0
  %657 = vmatpush1.msra.mxu0 %v58
  %658 = vmatprep.subr.mxu0 0.0
  %659 = vmatpush1.msra.mxu0 %v57
  %660 = vmatprep.subr.mxu0 0.0
  %661 = vmatpush1.msra.mxu0 %v56
  %662 = vmatprep.subr.mxu0 0.0
  %663 = vmatpush1.msra.mxu0 %v55
  %664 = vmatprep.subr.mxu0 0.0
  %665 = vmatpush1.msra.mxu0 %v54
  %666 = vmatprep.subr.mxu0 0.0
  %667 = vmatpush1.msra.mxu0 %v53
  %668 = vmatprep.subr.mxu0 0.0
  %669 = vmatpush1.msra.mxu0 %v52
  %670 = vmatprep.subr.mxu0 0.0
  %671 = vmatpush2.msra.mxu0 0.0
  %672 = vmatprep.subr.mxu0 0.0
  %673 = vmatpush2.msra.mxu0 0.0
  %674 = vmatprep.subr.mxu0 0.0
  %675 = vmatpush2.msra.mxu0 0.0
  %676 = vmatprep.subr.mxu0 0.0
  %677 = vmatpush2.msra.mxu0 0.0
  %678 = vmatprep.subr.mxu0 0.0
  %679 = vmatpush2.msra.mxu0 0.0
  %680 = vmatprep.subr.mxu0 0.0
  %681 = vmatpush2.msra.mxu0 0.0
  %682 = vmatprep.subr.mxu0 0.0
  %683 = vmatpush2.msra.mxu0 0.0
  %684 = vmatprep.subr.mxu0 0.0
  %685 = vmatpush2.msra.mxu0 0.0
  %686 = vmatprep.subr.mxu0 0.0
  %687 = vmatpush2.msra.mxu0 0.0
  %688 = vmatprep.subr.mxu0 0.0
  %689 = vmatpush2.msra.mxu0 0.0
  %690 = vmatprep.subr.mxu0 0.0
  %691 = vmatpush2.msra.mxu0 0.0
  %692 = vmatprep.subr.mxu0 0.0
  %693 = vmatpush2.msra.mxu0 0.0
  %694 = vmatprep.subr.mxu0 0.0
  %695 = vmatpush2.msra.mxu0 0.0
  %696 = vmatprep.subr.mxu0 0.0
  %697 = vmatpush2.msra.mxu0 0.0
  %698 = vmatprep.subr.mxu0 0.0
  %699 = vmatpush2.msra.mxu0 0.0
  %700 = vmatprep.subr.mxu0 0.0
  %701 = vmatpush2.msra.mxu0 0.0
  %702 = vmatprep.mubr.f32.mxu0 0.0
  %703 = vmatmul.mubr.f32.gmra.mxu0 %v636
  %v704 = vpop.f32.mrf.mxu0
  %v705 = vadd.f32 %v66, %v704
  %v706 = vpop.f32.mrf.mxu0
  %707 = vdwg.mxu0
  %v708 = vmax.f32 %v705, 0.0
  %v709 = vand.u32 2147483647, %v705
  %v710 = vsub.f32 0.0, %v709
  %v711 = vmul.f32 %v710, 1.442695
  %v712 = vpow.pop %v711
  %v713 = vmul.f32 %v712, 0.5
  %v714 = vadd.f32 %v713, 0.5
  %v715 = vlog2.pop %v714
  %v716 = vmul.f32 %v715, 0.6931472
  %v717 = vadd.f32 %v708, %v716
  %718 = vst.msk [vmem:[%s5 + $0x18] sm:$0x1] %vm624, %v717
  // Predicated region
  $region22: #{block_forward.1} parent=0 // pred_check
    _
  $region23: #{block_forward.1} parent=0 // pred_check_branch
    %720 = sbr.rel (0) target = $region25
  $region24: #{block_forward.1} parent=0 // pred_region
    _
  $region25: #{block_forward.1} parent=0 // pred_fallthru
    _
  // Predicated region
  $region26: #{block_forward.1} parent=0 // pred_check
    _
  $region27: #{block_forward.1} parent=0 // pred_check_branch
    %722 = sbr.rel (0) target = $region29
  $region28: #{block_forward.1} parent=0 // pred_region
    _
  $region29: #{block_forward.1} parent=0 // pred_fallthru
    _

</llo_original>
